<compile_context>
chip_gen: v7x
topology: tpu7x:2x2x1
jax: 0.10.0
libtpu: 0.0.40
codegen_flags: <defaults>
</compile_context>

<pallas_src>
import functools

import jax
import jax.numpy as jnp
from jax.experimental import pallas as pl
from jax.experimental.pallas import tpu as pltpu


def _vmem_capacity_bytes() -> int:
    """Physical VMEM per TensorCore; conservative fallback if unqueryable."""
    try:
        info = pltpu.get_tpu_info()
        cap = int(getattr(info, "vmem_capacity_bytes", 0) or 0)
        if cap > 0:
            return cap
    except Exception:
        pass
    return 64 * 1024 * 1024  # v7x per-core VMEM: safe lower bound everywhere


def _pick_block_rows(total_rows: int, width: int, itemsize: int,
                     tile_budget: int) -> int:
    """Largest sublane-aligned batch tile whose working set fits the budget."""
    # Sublane packing: f32 -> 8 rows/tile, bf16 -> 16, int8/fp8 -> 32.
    align = 8 * max(1, 4 // max(1, itemsize))
    # 3 inputs x double buffer x itemsize + ~3 full-size f32 temporaries.
    bytes_per_row = width * (6 * itemsize + 12)
    tb = max(tile_budget // bytes_per_row, 1)
    # Megacore: aim for >= 2 grid steps so a v7x chip splits the batch across
    # both TensorCores; costs at most one extra ~0.35us step on v5e/v6e.
    tb = min(tb, pl.cdiv(total_rows, 2))
    if tb >= total_rows:
        return total_rows
    tb = (tb // align) * align
    if tb == 0:
        tb = min(align, total_rows)
    return min(tb, total_rows)


def _make_in_spec(block_rows: int, width: int, buffers: int) -> pl.BlockSpec:
    index_map = lambda i: (i, 0)
    if buffers > 2 and hasattr(pl, "Buffered"):
        try:
            return pl.BlockSpec((block_rows, width), index_map,
                                pipeline_mode=pl.Buffered(buffers))
        except TypeError:
            pass  # older jax without pipeline_mode: fall back to default 2
    return pl.BlockSpec((block_rows, width), index_map)


def _triplet_loss_kernel(a_ref, p_ref, n_ref, out_ref, *,
                         margin: float, batch: int, block_rows: int,
                         pack: int, feat: int, ragged: bool):
    i = pl.program_id(0)
    rows = a_ref.shape[0]

    # Cast right after load (bf16 -> f32 BEFORE the subtraction, matching the
    # reference); no-op for f32 inputs.
    a = a_ref[...].astype(jnp.float32)

    # Positive branch first: dp is fully reduced (tiny (rows,1) vectors)
    # before the negative block is touched -> at most one full-size f32
    # diff/square is live at any time.
    d = a - p_ref[...].astype(jnp.float32)
    sq = d * d
    dp = [jnp.sum(sq[:, s * feat:(s + 1) * feat], axis=1, keepdims=True)
          for s in range(pack)]

    d = a - n_ref[...].astype(jnp.float32)
    sq = d * d
    dn = [jnp.sum(sq[:, s * feat:(s + 1) * feat], axis=1, keepdims=True)
          for s in range(pack)]

    def block_partial(mask_batch):
        total = jnp.zeros((), jnp.float32)
        row = None
        if mask_batch:
            row = jax.lax.broadcasted_iota(jnp.int32, (rows, 1), 0)
        for s in range(pack):
            l = jnp.maximum(dp[s] + margin - dn[s], 0.0)
            l = l * l
            if mask_batch:
                # Original (pre-packing) row index of this segment.
                orig = (i * block_rows + row) * pack + s
                l = jnp.where(orig < batch, l, 0.0)
            total = total + jnp.sum(l)
        return total

    def store(val):
        # Lane-dense (1, 128) store: partial in lane 0, exact zeros elsewhere.
        lane = jax.lax.broadcasted_iota(jnp.int32, (1, 128), 1)
        out_ref[...] = jnp.where(lane == 0, val, 0.0)

    if ragged:
        # Mask padded rows only on the last grid step; full tiles stay unmasked.
        last = pl.num_programs(0) - 1

        @pl.when(i == last)
        def _():
            store(block_partial(True))

        @pl.when(i != last)
        def _():
            store(block_partial(False))
    else:
        store(block_partial(False))


def triplet_loss(anchor, positive, negative, margin: float, *,
                 block_rows: int | None = None):
    """anchor/positive/negative: (B, D). Returns scalar float32 loss.

    If block_rows is given it must be a multiple of 8 (16 for bf16) or equal
    the (possibly lane-packed) number of rows.
    """
    B, D = anchor.shape
    assert positive.shape == (B, D) and negative.shape == (B, D)
    itemsize = jnp.dtype(anchor.dtype).itemsize

    # Lane-dense packing for small feature dims: (B, D) -> (B/k, k*D), k*D=128.
    pack = 1
    if D < 128 and 128 % D == 0 and B % (128 // D) == 0:
        pack = 128 // D
    if pack > 1:
        a = anchor.reshape(B // pack, pack * D)
        p = positive.reshape(B // pack, pack * D)
        n = negative.reshape(B // pack, pack * D)
    else:
        a, p, n = anchor, positive, negative
    total_rows, width = a.shape
    feat = width // pack

    vmem_cap = _vmem_capacity_bytes()                      # 128 MiB v5e/v6e, 64 MiB v7x
    vmem_limit = (vmem_cap * 3) // 4                       # ~75% scoped limit
    vmem_limit = max(32 * 1024 * 1024, min(vmem_limit, 100 * 1024 * 1024))
    tile_budget = vmem_limit // 2

    if block_rows is None:
        block_rows = _pick_block_rows(total_rows, width, itemsize, tile_budget)
    block_rows = min(block_rows, total_rows)
    num_blocks = pl.cdiv(total_rows, block_rows)
    ragged = (total_rows % block_rows) != 0

    # Deeper pipelining only when per-step blocks are tiny and the grid is long.
    block_bytes = block_rows * width * itemsize
    buffers = 3 if (block_bytes <= (1 << 20) and num_blocks > 2) else 2
    in_spec = _make_in_spec(block_rows, width, buffers)

    kernel = functools.partial(
        _triplet_loss_kernel,
        margin=float(margin), batch=B, block_rows=block_rows,
        pack=pack, feat=feat, ragged=ragged,
    )

    partials = pl.pallas_call(
        kernel,
        out_shape=jax.ShapeDtypeStruct((num_blocks, 128), jnp.float32),
        grid=(num_blocks,),
        in_specs=[in_spec, in_spec, in_spec],
        out_specs=pl.BlockSpec((1, 128), lambda i: (i, 0)),
        compiler_params=pltpu.CompilerParams(
            dimension_semantics=("parallel",),   # shards batch across v7x's 2 TCs
            vmem_limit_bytes=int(vmem_limit),
        ),
    )(a, p, n)

    # Sum of per-block partials divided by the TRUE batch size.
    return jnp.sum(partials) / B


def triplet_loss_ref(anchor, positive, negative, margin: float):
    a = anchor.astype(jnp.float32)
    p = positive.astype(jnp.float32)
    n = negative.astype(jnp.float32)
    dp = jnp.sum((a - p) ** 2, axis=1)
    dn = jnp.sum((a - n) ** 2, axis=1)
    losses = jax.nn.relu(dp + margin - dn) ** 2
    return jnp.mean(losses)


if __name__ == "__main__":
    key = jax.random.PRNGKey(0)
    ks = jax.random.split(key, 9)
    margin = 0.5  # module __init__ parameter, fixed deterministically

    # Test 1: small-D packed path (B=8, D=32 -> 4 rows per 128-lane packed row).
    B, D = 8, 32
    a1 = jax.random.normal(ks[0], (B, D), dtype=jnp.float32)
    p1 = jax.random.normal(ks[1], (B, D), dtype=jnp.float32)
    n1 = jax.random.normal(ks[2], (B, D), dtype=jnp.float32)
    out1 = jax.block_until_ready(triplet_loss(a1, p1, n1, margin))
    ref1 = triplet_loss_ref(a1, p1, n1, margin)
    assert jnp.allclose(out1, ref1, rtol=1e-5, atol=1e-5), (out1, ref1)

    # Test 2: unpacked multi-block grid with a ragged last tile (20 = 8+8+4),
    # exercising the pl.when-gated mask and the megacore >=2-step split.
    B2, D2 = 20, 128
    a2 = jax.random.normal(ks[3], (B2, D2), dtype=jnp.float32)
    p2 = jax.random.normal(ks[4], (B2, D2), dtype=jnp.float32)
    n2 = jax.random.normal(ks[5], (B2, D2), dtype=jnp.float32)
    out2 = jax.block_until_ready(triplet_loss(a2, p2, n2, margin))
    ref2 = triplet_loss_ref(a2, p2, n2, margin)
    assert jnp.allclose(out2, ref2, rtol=1e-5, atol=1e-5), (out2, ref2)

    # Test 3: bf16 inputs, packed (D=64 -> k=2), 16-row sublane alignment,
    # cast-before-subtract matching the reference.
    B3, D3 = 32, 64
    a3 = jax.random.normal(ks[6], (B3, D3), dtype=jnp.bfloat16)
    p3 = jax.random.normal(ks[7], (B3, D3), dtype=jnp.bfloat16)
    n3 = jax.random.normal(ks[8], (B3, D3), dtype=jnp.bfloat16)
    out3 = jax.block_until_ready(triplet_loss(a3, p3, n3, margin))
    ref3 = triplet_loss_ref(a3, p3, n3, margin)
    assert jnp.allclose(out3, ref3, rtol=1e-4, atol=1e-4), (out3, ref3)

    print("KERNEL_OK")
</pallas_src>

<mosaic_0001>
module attributes {stable_mosaic.version = 11 : i64} {
  func.func @_triplet_loss_kernel(%arg0: i32, %arg1: memref<2x128xf32, #tpu.memory_space<vmem>>, %arg2: memref<2x128xf32, #tpu.memory_space<vmem>>, %arg3: memref<2x128xf32, #tpu.memory_space<vmem>>, %arg4: memref<1x128xf32, #tpu.memory_space<vmem>>) attributes {dimension_semantics = [#tpu.dimension_semantics<parallel>], iteration_bounds = array<i64: 1>, scalar_prefetch = 0 : i64, scratch_operands = 0 : i64, tpu.core_type = #tpu.core_type<tc>, window_params = [{transform_indices = @transform_0, window_bounds = array<i64: 2, 128>}, {transform_indices = @transform_1, window_bounds = array<i64: 2, 128>}, {transform_indices = @transform_2, window_bounds = array<i64: 2, 128>}, {transform_indices = @transform_3, window_bounds = array<i64: 1, 128>}]} {
    %c0 = arith.constant 0 : index
    %c0_0 = arith.constant 0 : index
    %0 = vector.load %arg1[%c0, %c0_0] : memref<2x128xf32, #tpu.memory_space<vmem>>, vector<2x128xf32>
    %c0_1 = arith.constant 0 : index
    %c0_2 = arith.constant 0 : index
    %1 = vector.load %arg2[%c0_1, %c0_2] : memref<2x128xf32, #tpu.memory_space<vmem>>, vector<2x128xf32>
    %2 = arith.subf %0, %1 : vector<2x128xf32>
    %3 = arith.mulf %2, %2 : vector<2x128xf32>
    %4 = vector.extract_strided_slice %3 {offsets = [0, 0], sizes = [2, 32], strides = [1, 1]} : vector<2x128xf32> to vector<2x32xf32>
    %cst = arith.constant dense<0.000000e+00> : vector<2xf32>
    %5 = vector.multi_reduction <add>, %4, %cst [1] : vector<2x32xf32> to vector<2xf32>
    %6 = vector.shape_cast %5 : vector<2xf32> to vector<2x1xf32>
    %7 = vector.extract_strided_slice %3 {offsets = [0, 32], sizes = [2, 32], strides = [1, 1]} : vector<2x128xf32> to vector<2x32xf32>
    %cst_3 = arith.constant dense<0.000000e+00> : vector<2xf32>
    %8 = vector.multi_reduction <add>, %7, %cst_3 [1] : vector<2x32xf32> to vector<2xf32>
    %9 = vector.shape_cast %8 : vector<2xf32> to vector<2x1xf32>
    %10 = vector.extract_strided_slice %3 {offsets = [0, 64], sizes = [2, 32], strides = [1, 1]} : vector<2x128xf32> to vector<2x32xf32>
    %cst_4 = arith.constant dense<0.000000e+00> : vector<2xf32>
    %11 = vector.multi_reduction <add>, %10, %cst_4 [1] : vector<2x32xf32> to vector<2xf32>
    %12 = vector.shape_cast %11 : vector<2xf32> to vector<2x1xf32>
    %13 = vector.extract_strided_slice %3 {offsets = [0, 96], sizes = [2, 32], strides = [1, 1]} : vector<2x128xf32> to vector<2x32xf32>
    %cst_5 = arith.constant dense<0.000000e+00> : vector<2xf32>
    %14 = vector.multi_reduction <add>, %13, %cst_5 [1] : vector<2x32xf32> to vector<2xf32>
    %15 = vector.shape_cast %14 : vector<2xf32> to vector<2x1xf32>
    %c0_6 = arith.constant 0 : index
    %c0_7 = arith.constant 0 : index
    %16 = vector.load %arg3[%c0_6, %c0_7] : memref<2x128xf32, #tpu.memory_space<vmem>>, vector<2x128xf32>
    %17 = arith.subf %0, %16 : vector<2x128xf32>
    %18 = arith.mulf %17, %17 : vector<2x128xf32>
    %19 = vector.extract_strided_slice %18 {offsets = [0, 0], sizes = [2, 32], strides = [1, 1]} : vector<2x128xf32> to vector<2x32xf32>
    %cst_8 = arith.constant dense<0.000000e+00> : vector<2xf32>
    %20 = vector.multi_reduction <add>, %19, %cst_8 [1] : vector<2x32xf32> to vector<2xf32>
    %21 = vector.shape_cast %20 : vector<2xf32> to vector<2x1xf32>
    %22 = vector.extract_strided_slice %18 {offsets = [0, 32], sizes = [2, 32], strides = [1, 1]} : vector<2x128xf32> to vector<2x32xf32>
    %cst_9 = arith.constant dense<0.000000e+00> : vector<2xf32>
    %23 = vector.multi_reduction <add>, %22, %cst_9 [1] : vector<2x32xf32> to vector<2xf32>
    %24 = vector.shape_cast %23 : vector<2xf32> to vector<2x1xf32>
    %25 = vector.extract_strided_slice %18 {offsets = [0, 64], sizes = [2, 32], strides = [1, 1]} : vector<2x128xf32> to vector<2x32xf32>
    %cst_10 = arith.constant dense<0.000000e+00> : vector<2xf32>
    %26 = vector.multi_reduction <add>, %25, %cst_10 [1] : vector<2x32xf32> to vector<2xf32>
    %27 = vector.shape_cast %26 : vector<2xf32> to vector<2x1xf32>
    %28 = vector.extract_strided_slice %18 {offsets = [0, 96], sizes = [2, 32], strides = [1, 1]} : vector<2x128xf32> to vector<2x32xf32>
    %cst_11 = arith.constant dense<0.000000e+00> : vector<2xf32>
    %29 = vector.multi_reduction <add>, %28, %cst_11 [1] : vector<2x32xf32> to vector<2xf32>
    %30 = vector.shape_cast %29 : vector<2xf32> to vector<2x1xf32>
    %cst_12 = arith.constant 5.000000e-01 : f32
    %31 = vector.broadcast %cst_12 : f32 to vector<2x1xf32>
    %32 = arith.addf %6, %31 : vector<2x1xf32>
    %33 = arith.subf %32, %21 : vector<2x1xf32>
    %cst_13 = arith.constant 0.000000e+00 : f32
    %34 = vector.broadcast %cst_13 : f32 to vector<2x1xf32>
    %35 = arith.maximumf %33, %34 : vector<2x1xf32>
    %36 = arith.mulf %35, %35 : vector<2x1xf32>
    %37 = vector.shape_cast %36 : vector<2x1xf32> to vector<1x2x1xf32>
    %cst_14 = arith.constant dense<0.000000e+00> : vector<1xf32>
    %38 = vector.multi_reduction <add>, %37, %cst_14 [1, 2] : vector<1x2x1xf32> to vector<1xf32>
    %39 = vector.shape_cast %38 : vector<1xf32> to vector<1x1x1xf32>
    %40 = vector.extract %39[0, 0, 0] : f32 from vector<1x1x1xf32>
    %cst_15 = arith.constant 0.000000e+00 : f32
    %41 = arith.addf %cst_15, %40 : f32
    %cst_16 = arith.constant 5.000000e-01 : f32
    %42 = vector.broadcast %cst_16 : f32 to vector<2x1xf32>
    %43 = arith.addf %9, %42 : vector<2x1xf32>
    %44 = arith.subf %43, %24 : vector<2x1xf32>
    %cst_17 = arith.constant 0.000000e+00 : f32
    %45 = vector.broadcast %cst_17 : f32 to vector<2x1xf32>
    %46 = arith.maximumf %44, %45 : vector<2x1xf32>
    %47 = arith.mulf %46, %46 : vector<2x1xf32>
    %48 = vector.shape_cast %47 : vector<2x1xf32> to vector<1x2x1xf32>
    %cst_18 = arith.constant dense<0.000000e+00> : vector<1xf32>
    %49 = vector.multi_reduction <add>, %48, %cst_18 [1, 2] : vector<1x2x1xf32> to vector<1xf32>
    %50 = vector.shape_cast %49 : vector<1xf32> to vector<1x1x1xf32>
    %51 = vector.extract %50[0, 0, 0] : f32 from vector<1x1x1xf32>
    %52 = arith.addf %41, %51 : f32
    %cst_19 = arith.constant 5.000000e-01 : f32
    %53 = vector.broadcast %cst_19 : f32 to vector<2x1xf32>
    %54 = arith.addf %12, %53 : vector<2x1xf32>
    %55 = arith.subf %54, %27 : vector<2x1xf32>
    %cst_20 = arith.constant 0.000000e+00 : f32
    %56 = vector.broadcast %cst_20 : f32 to vector<2x1xf32>
    %57 = arith.maximumf %55, %56 : vector<2x1xf32>
    %58 = arith.mulf %57, %57 : vector<2x1xf32>
    %59 = vector.shape_cast %58 : vector<2x1xf32> to vector<1x2x1xf32>
    %cst_21 = arith.constant dense<0.000000e+00> : vector<1xf32>
    %60 = vector.multi_reduction <add>, %59, %cst_21 [1, 2] : vector<1x2x1xf32> to vector<1xf32>
    %61 = vector.shape_cast %60 : vector<1xf32> to vector<1x1x1xf32>
    %62 = vector.extract %61[0, 0, 0] : f32 from vector<1x1x1xf32>
    %63 = arith.addf %52, %62 : f32
    %cst_22 = arith.constant 5.000000e-01 : f32
    %64 = vector.broadcast %cst_22 : f32 to vector<2x1xf32>
    %65 = arith.addf %15, %64 : vector<2x1xf32>
    %66 = arith.subf %65, %30 : vector<2x1xf32>
    %cst_23 = arith.constant 0.000000e+00 : f32
    %67 = vector.broadcast %cst_23 : f32 to vector<2x1xf32>
    %68 = arith.maximumf %66, %67 : vector<2x1xf32>
    %69 = arith.mulf %68, %68 : vector<2x1xf32>
    %70 = vector.shape_cast %69 : vector<2x1xf32> to vector<1x2x1xf32>
    %cst_24 = arith.constant dense<0.000000e+00> : vector<1xf32>
    %71 = vector.multi_reduction <add>, %70, %cst_24 [1, 2] : vector<1x2x1xf32> to vector<1xf32>
    %72 = vector.shape_cast %71 : vector<1xf32> to vector<1x1x1xf32>
    %73 = vector.extract %72[0, 0, 0] : f32 from vector<1x1x1xf32>
    %74 = arith.addf %63, %73 : f32
    %75 = tpu.iota {dimensions = array<i32: 1>} : vector<1x128xi32>
    %c0_i32 = arith.constant 0 : i32
    %76 = vector.broadcast %c0_i32 : i32 to vector<1x128xi32>
    %77 = arith.cmpi eq, %75, %76 : vector<1x128xi32>
    %cst_25 = arith.constant 0.000000e+00 : f32
    %78 = vector.broadcast %74 : f32 to vector<1x128xf32>
    %79 = vector.broadcast %cst_25 : f32 to vector<1x128xf32>
    %80 = arith.select %77, %78, %79 : vector<1x128xi1>, vector<1x128xf32>
    %c0_26 = arith.constant 0 : index
    %c0_27 = arith.constant 0 : index
    %81 = vector.load %arg4[%c0_26, %c0_27] : memref<1x128xf32, #tpu.memory_space<vmem>>, vector<1x128xf32>
    tpu.vector_store %arg4[%c0_26, %c0_27], %80 {strides = array<i32>} : memref<1x128xf32, #tpu.memory_space<vmem>>, vector<1x128xf32>,
    return
  }
  func.func @transform_0(%arg0: i32) -> (i32, i32) {
    %c0_i32 = arith.constant 0 : i32
    %c0_i32_0 = arith.constant 0 : i32
    return %arg0, %c0_i32 : i32, i32
  }
  func.func @transform_1(%arg0: i32) -> (i32, i32) {
    %c0_i32 = arith.constant 0 : i32
    %c0_i32_0 = arith.constant 0 : i32
    return %arg0, %c0_i32 : i32, i32
  }
  func.func @transform_2(%arg0: i32) -> (i32, i32) {
    %c0_i32 = arith.constant 0 : i32
    %c0_i32_0 = arith.constant 0 : i32
    return %arg0, %c0_i32 : i32, i32
  }
  func.func @transform_3(%arg0: i32) -> (i32, i32) {
    %c0_i32 = arith.constant 0 : i32
    %c0_i32_0 = arith.constant 0 : i32
    return %arg0, %c0_i32 : i32, i32
  }
}

</mosaic_0001>

<llo_original>
// kernel: tpu_custom_call.1
$region0: #{tpu_custom_call.1}
  #allocation0 [shape = 'u32[]', space=smem, size = 0x4, offset = 0x4, fixed_abs, tag = 'smem constant byte address 0x4 - core index']
  #allocation1 [shape = 'u32[144,128]{1,0:T(1,128)}', space=vmem, size = 0x12000, scoped, tag = 'internal scratch']
  %s0 = inlined_call_operand.hbm [shape: f32[2,128], index: 0, kind: input, shape index: {}]
  %s1 = inlined_call_operand.vmem [shape: f32[2,128], index: 1, kind: input, shape index: {}]
  %s2 = inlined_call_operand.vmem [shape: f32[2,128], index: 2, kind: input, shape index: {}]
  %s3 = inlined_call_operand.hbm [shape: f32[1,128], index: 3, kind: output, shape index: {}]
  %s4 = sld [smem:[#allocation0]]
  $region26: #{tpu_custom_call.1} parent=0
    _
  %s6 = ssub.s32 1, %s4
  %s7 = scalar_select 0, %s6, %s4
  $region1: #{tpu_custom_call.1} parent=0
    #allocation2 [shape = 'u8[1024]{0}', space=vmem, size = 0x400, scoped, tag = 'input window, operand 0, single buffered']
    #allocation3 [shape = 's32[1]{0}', space=sflag, size = 0x4, scoped, tag = 'scoped memory for tpu_custom_call.1']
    #allocation4 [shape = 's32[1]{0}', space=sflag, size = 0x4, scoped, tag = 'scoped memory for tpu_custom_call.1']
    #allocation5 [shape = 'u8[512]{0}', space=vmem, size = 0x400, scoped, tag = 'output window, operand 0, single buffered']
    %8 = vsyncpa [#allocation3], 0
    %9 = vsyncpa [#allocation4], 0
    // Predicated region
    $region2: #{tpu_custom_call.1} parent=1 // pred_check
      _
    $region3: #{tpu_custom_call.1} parent=1 // pred_check_branch
      %11 = sbr.rel (0) target = $region5
    $region4: #{tpu_custom_call.1} parent=1 // pred_region
      %s13 = ssub.s32 32, 32
      %14 = vsyncadd [#allocation3], %s13
      %s16 = sshll.u32 [#allocation2], 4
      %s17 = int_to_ptr.vmem [resolvable:$true] %s16
      %19 = dma.hbm_to_vmem [thread:$0]  %s0, 32, %s17, [#allocation3]
    $region5: #{tpu_custom_call.1} parent=1 // pred_fallthru
      _
    // Predicated region
    $region6: #{tpu_custom_call.1} parent=1 // pred_check
      _
    $region7: #{tpu_custom_call.1} parent=1 // pred_check_branch
      %21 = sbr.rel (0) target = $region9
    $region8: #{tpu_custom_call.1} parent=1 // pred_region
      _
    $region9: #{tpu_custom_call.1} parent=1 // pred_fallthru
      _
    // Predicated region
    $region10: #{tpu_custom_call.1} parent=1 // pred_check
      _
    $region11: #{tpu_custom_call.1} parent=1 // pred_check_branch
      %23 = sbr.rel (0) target = $region13
    $region12: #{tpu_custom_call.1} parent=1 // pred_region
      _
    $region13: #{tpu_custom_call.1} parent=1 // pred_fallthru
      _
    // Predicated region
    $region14: #{tpu_custom_call.1} parent=1 // pred_check
      _
    $region15: #{tpu_custom_call.1} parent=1 // pred_check_branch
      %25 = sbr.rel (0) target = $region17
    $region16: #{tpu_custom_call.1} parent=1 // pred_region
      %26 = dma.done [#allocation3], 32
    $region17: #{tpu_custom_call.1} parent=1 // pred_fallthru
      _
    %v27 = vld [vmem:[#allocation2] sm:$0x3]
    %v28 = vld [vmem:[%s1] sm:$0x3]
    %v29 = vsub.f32 %v27, %v28
    %v30 = vmul.f32 %v29, %v29
    %vm31 = vcmask 254976
    %v32 = vsel %vm31, %v30, 0.0
    %33 = vadd.xlane.f32.xlu0 %v32
    %v34 = vpop.xlane.xlu0 %33
    %36 = vrot.lane.b32.xlu0 %v30, 96
    %v37 = vpop.permute.xlu0 %36
    %v39 = vsel %vm31, %v37, 0.0
    %40 = vadd.xlane.f32.xlu0 %v39
    %v41 = vpop.xlane.xlu0 %40
    %42 = vrot.lane.b32.xlu0 %v30, 64
    %v43 = vpop.permute.xlu0 %42
    %v45 = vsel %vm31, %v43, 0.0
    %46 = vadd.xlane.f32.xlu0 %v45
    %v47 = vpop.xlane.xlu0 %46
    %48 = vrot.lane.b32.xlu0 %v30, 32
    %v49 = vpop.permute.xlu0 %48
    %v51 = vsel %vm31, %v49, 0.0
    %52 = vadd.xlane.f32.xlu0 %v51
    %v53 = vpop.xlane.xlu0 %52
    %v54 = vld [vmem:[%s2] sm:$0x3]
    %v55 = vsub.f32 %v27, %v54
    %v56 = vmul.f32 %v55, %v55
    %v57 = vsel %vm31, %v56, 0.0
    %58 = vadd.xlane.f32.xlu0 %v57
    %v59 = vpop.xlane.xlu0 %58
    %61 = vrot.lane.b32.xlu0 %v56, 96
    %v62 = vpop.permute.xlu0 %61
    %v64 = vsel %vm31, %v62, 0.0
    %65 = vadd.xlane.f32.xlu0 %v64
    %v66 = vpop.xlane.xlu0 %65
    %67 = vrot.lane.b32.xlu0 %v56, 64
    %v68 = vpop.permute.xlu0 %67
    %v70 = vsel %vm31, %v68, 0.0
    %71 = vadd.xlane.f32.xlu0 %v70
    %v72 = vpop.xlane.xlu0 %71
    %73 = vrot.lane.b32.xlu0 %v56, 32
    %v74 = vpop.permute.xlu0 %73
    %v76 = vsel %vm31, %v74, 0.0
    %77 = vadd.xlane.f32.xlu0 %v76
    %v78 = vpop.xlane.xlu0 %77
    %v79 = vadd.f32 %v34, 0.5
    %v80 = vsub.f32 %v79, %v59
    %v81 = vmax.f32 %v80, 0.0
    %v82 = vmul.f32 %v81, %v81
    %vm83 = vcmask 1024
    %v84 = vsel %vm83, %v82, 0.0
    %85 = vadd.xlane.f32.xlu0 %v84
    %v86 = vpop.xlane.xlu0 %85
    %v87 = vrot.slane %v86, 4
    %v88 = vadd.f32 %v86, %v87
    %v89 = vrot.slane %v88, 2
    %v90 = vadd.f32 %v88, %v89
    %v91 = vrot.slane %v90, 1
    %v92 = vadd.f32 %v90, %v91
    %s93 = vtos %v92
    %s94 = sadd.f32 %s93, 0.0
    %v95 = vadd.f32 %v41, 0.5
    %v96 = vsub.f32 %v95, %v66
    %v97 = vmax.f32 %v96, 0.0
    %v98 = vmul.f32 %v97, %v97
    %v99 = vsel %vm83, %v98, 0.0
    %100 = vadd.xlane.f32.xlu0 %v99
    %v101 = vpop.xlane.xlu0 %100
    %v102 = vrot.slane %v101, 4
    %v103 = vadd.f32 %v101, %v102
    %v104 = vrot.slane %v103, 2
    %v105 = vadd.f32 %v103, %v104
    %v106 = vrot.slane %v105, 1
    %v107 = vadd.f32 %v105, %v106
    %s108 = vtos %v107
    %s109 = sadd.f32 %s94, %s108
    %v110 = vadd.f32 %v47, 0.5
    %v111 = vsub.f32 %v110, %v72
    %v112 = vmax.f32 %v111, 0.0
    %v113 = vmul.f32 %v112, %v112
    %v114 = vsel %vm83, %v113, 0.0
    %115 = vadd.xlane.f32.xlu0 %v114
    %v116 = vpop.xlane.xlu0 %115
    %v117 = vrot.slane %v116, 4
    %v118 = vadd.f32 %v116, %v117
    %v119 = vrot.slane %v118, 2
    %v120 = vadd.f32 %v118, %v119
    %v121 = vrot.slane %v120, 1
    %v122 = vadd.f32 %v120, %v121
    %s123 = vtos %v122
    %s124 = sadd.f32 %s109, %s123
    %v125 = vadd.f32 %v53, 0.5
    %v126 = vsub.f32 %v125, %v78
    %v127 = vmax.f32 %v126, 0.0
    %v128 = vmul.f32 %v127, %v127
    %v129 = vsel %vm83, %v128, 0.0
    %130 = vadd.xlane.f32.xlu0 %v129
    %v131 = vpop.xlane.xlu0 %130
    %v132 = vrot.slane %v131, 4
    %v133 = vadd.f32 %v131, %v132
    %v134 = vrot.slane %v133, 2
    %v135 = vadd.f32 %v133, %v134
    %v136 = vrot.slane %v135, 1
    %v137 = vadd.f32 %v135, %v136
    %s138 = vtos %v137
    %s139 = sadd.f32 %s124, %s138
    %v140 = vlaneseq
    %v141 = vand.u32 %v140, 127
    %vm142 = vcmp.eq.s32.totalorder %v141, 0
    %v143 = vstv %s139
    %v144 = vsel %vm142, %v143, 0.0
    %145 = vst [vmem:[#allocation5] sm:$0x1] %v144
    // Predicated region
    $region18: #{tpu_custom_call.1} parent=1 // pred_check
      _
    $region19: #{tpu_custom_call.1} parent=1 // pred_check_branch
      %147 = sbr.rel (0) target = $region21
    $region20: #{tpu_custom_call.1} parent=1 // pred_region
      %s149 = ssub.s32 16, 16
      %150 = vsyncadd [#allocation4], %s149
      %s152 = sshll.u32 [#allocation5], 4
      %s153 = int_to_ptr.vmem [resolvable:$true] %s152
      %155 = dma.vmem_to_hbm [thread:$0]  %s153, 16, %s3, [#allocation4]
    $region21: #{tpu_custom_call.1} parent=1 // pred_fallthru
      _
    // Predicated region
    $region22: #{tpu_custom_call.1} parent=1 // pred_check
      _
    $region23: #{tpu_custom_call.1} parent=1 // pred_check_branch
      %157 = sbr.rel (0) target = $region25
    $region24: #{tpu_custom_call.1} parent=1 // pred_region
      %158 = dma.done [#allocation4], 16
    $region25: #{tpu_custom_call.1} parent=1 // pred_fallthru
      _
    %159 = vsyncpa [#allocation3], 1
    %160 = vsyncpa [#allocation4], 1

</llo_original>
